<compile_context>
chip_gen: v5e
topology: v5e:2x2
jax: 0.10.0
libtpu: 0.0.40
codegen_flags: <defaults>
</compile_context>

<pallas_src>
import jax
import jax.numpy as jnp
from jax.experimental import pallas as pl
from jax.experimental.pallas import tpu as pltpu

_LANE = 128
_TARGET_BLOCK_BYTES = 1 << 20  # ~1 MiB blocks: >=85% of HBM roofline, safe in VMEM


def _mexican_hat_kernel(alpha_sq_ref, x_ref, o_ref):
    # alpha_sq_ref: SMEM scalar (shape (1,)), x_ref/o_ref: VMEM tiles (orig dtype).
    a2 = alpha_sq_ref[0]
    x = x_ref[...].astype(jnp.float32)   # widen in-register (free vs DMA)
    t = (x * x) * a2
    o_ref[...] = ((1.0 - t) * jnp.exp(-t)).astype(o_ref.dtype)


def _choose_layout(total, itemsize):
    """Pick a lane-dense (rows, W) view of the flat array and a row-block size."""
    pad = (-total) % _LANE                 # minimal pad: at most one 128-lane row
    padded = total + pad
    n_vec = padded // _LANE                # number of 128-lane vectors

    # Widest lane dim (multiple of 128, up to 4096) that divides the slab,
    # preferring layouts with >= 8 sublane rows.
    w_vec = 1
    for cand in (32, 16, 8, 4, 2, 1):
        if n_vec % cand == 0 and n_vec // cand >= 8:
            w_vec = cand
            break
    else:
        for cand in (32, 16, 8, 4, 2, 1):
            if n_vec % cand == 0:
                w_vec = cand
                break
    W = w_vec * _LANE
    rows = n_vec // w_vec

    # Row block: target ~1 MiB per block (multiple of 8 rows, or the full array).
    target_rows = max(1, _TARGET_BLOCK_BYTES // (W * itemsize))
    if target_rows >= rows:
        tile_rows = rows                   # single block == full array dims
    else:
        tile_rows = max(8, (target_rows // 8) * 8)

    # Keep >= ~8 grid steps on large arrays so v7x can shard across its 2 TCs.
    if rows >= 64:
        max_tile = max(8, ((rows // 8) // 8) * 8)
        tile_rows = min(tile_rows, max_tile)

    return pad, rows, W, tile_rows


def mexican_hat(x, alpha):
    """Apply the MexicanHat activation elementwise: (1 - (alpha*x)^2) * exp(-(alpha*x)^2)."""
    orig_shape = x.shape
    orig_dtype = x.dtype
    total = x.size

    pad, rows, W, tile_rows = _choose_layout(total, jnp.dtype(orig_dtype).itemsize)

    x_flat = jnp.ravel(x)
    if pad:  # only for shapes not divisible by 128 (skipped in the common case)
        x_flat = jnp.pad(x_flat, (0, pad))
    x2d = x_flat.reshape(rows, W)

    alpha_sq = jnp.reshape(jnp.asarray(alpha, jnp.float32) ** 2, (1,))

    out2d = pl.pallas_call(
        _mexican_hat_kernel,
        out_shape=jax.ShapeDtypeStruct((rows, W), orig_dtype),
        grid=(pl.cdiv(rows, tile_rows),),
        in_specs=[
            pl.BlockSpec(memory_space=pltpu.SMEM),               # alpha^2 scalar
            pl.BlockSpec((tile_rows, W), lambda i: (i, 0)),      # x block
        ],
        out_specs=pl.BlockSpec((tile_rows, W), lambda i: (i, 0)),
        compiler_params=pltpu.CompilerParams(
            dimension_semantics=("parallel",),
        ),
    )(alpha_sq, x2d)

    out_flat = out2d.reshape(rows * W)
    if pad:
        out_flat = out_flat[:total]
    return out_flat.reshape(orig_shape)


def mexican_hat_ref(x, alpha):
    t = (x.astype(jnp.float32) ** 2) * (jnp.float32(alpha) ** 2)
    return ((1.0 - t) * jnp.exp(-t)).astype(x.dtype)


if __name__ == "__main__":
    key = jax.random.PRNGKey(0)
    # NCHW input, matching the PyTorch convention.
    x = jax.random.normal(key, (2, 4, 16, 16), dtype=jnp.float32)

    # Deterministic parameter init: alpha_init = 1 (module default).
    alpha = jnp.float32(1.0)

    y = mexican_hat(x, alpha)
    y = jax.block_until_ready(y)

    y_ref = mexican_hat_ref(x, alpha)
    assert y.shape == x.shape and y.dtype == x.dtype
    assert jnp.allclose(y, y_ref, atol=1e-6, rtol=1e-6)

    print("KERNEL_OK")
</pallas_src>

<mosaic_0001>
module attributes {stable_mosaic.version = 11 : i64} {
  func.func @_mexican_hat_kernel(%arg0: i32, %arg1: memref<1xf32, #tpu.memory_space<smem>>, %arg2: memref<8x256xf32, #tpu.memory_space<vmem>>, %arg3: memref<8x256xf32, #tpu.memory_space<vmem>>) attributes {dimension_semantics = [#tpu.dimension_semantics<parallel>], iteration_bounds = array<i64: 1>, scalar_prefetch = 0 : i64, scratch_operands = 0 : i64, tpu.core_type = #tpu.core_type<tc>, window_params = [{transform_indices = @transform_0, window_bounds = array<i64: 1>}, {transform_indices = @transform_1, window_bounds = array<i64: 8, 256>}, {transform_indices = @transform_2, window_bounds = array<i64: 8, 256>}]} {
    %c0 = arith.constant 0 : index
    %0 = memref.load %arg1[%c0] : memref<1xf32, #tpu.memory_space<smem>>
    %c0_0 = arith.constant 0 : index
    %c0_1 = arith.constant 0 : index
    %1 = vector.load %arg2[%c0_0, %c0_1] : memref<8x256xf32, #tpu.memory_space<vmem>>, vector<8x256xf32>
    %2 = arith.mulf %1, %1 : vector<8x256xf32>
    %3 = vector.broadcast %0 : f32 to vector<8x256xf32>
    %4 = arith.mulf %2, %3 : vector<8x256xf32>
    %cst = arith.constant 1.000000e+00 : f32
    %5 = vector.broadcast %cst : f32 to vector<8x256xf32>
    %6 = arith.subf %5, %4 : vector<8x256xf32>
    %cst_2 = arith.constant 0.000000e+00 : f32
    %7 = vector.broadcast %cst_2 : f32 to vector<8x256xf32>
    %8 = arith.subf %7, %4 : vector<8x256xf32>
    %9 = math.exp %8 : vector<8x256xf32>
    %10 = arith.mulf %6, %9 : vector<8x256xf32>
    %c0_3 = arith.constant 0 : index
    %c0_4 = arith.constant 0 : index
    %11 = vector.load %arg3[%c0_3, %c0_4] : memref<8x256xf32, #tpu.memory_space<vmem>>, vector<8x256xf32>
    tpu.vector_store %arg3[%c0_3, %c0_4], %10 {strides = array<i32>} : memref<8x256xf32, #tpu.memory_space<vmem>>, vector<8x256xf32>,
    return
  }
  func.func @transform_0(%arg0: i32) -> i32 {
    %c0_i32 = arith.constant 0 : i32
    %c0_i32_0 = arith.constant 0 : i32
    return %c0_i32 : i32
  }
  func.func @transform_1(%arg0: i32) -> (i32, i32) {
    %c0_i32 = arith.constant 0 : i32
    %c0_i32_0 = arith.constant 0 : i32
    return %arg0, %c0_i32 : i32, i32
  }
  func.func @transform_2(%arg0: i32) -> (i32, i32) {
    %c0_i32 = arith.constant 0 : i32
    %c0_i32_0 = arith.constant 0 : i32
    return %arg0, %c0_i32 : i32, i32
  }
}

</mosaic_0001>

<llo_original>
// kernel: tpu_custom_call.1
$region0: #{tpu_custom_call.1}
  #allocation0 [shape = 'u32[]', space=smem, size = 0x4, offset = 0x4, fixed_abs, tag = 'smem constant byte address 0x4 - core index']
  #allocation1 [shape = 'u32[72,128]{1,0:T(1,128)}', space=vmem, size = 0x9000, scoped, tag = 'internal scratch']
  #allocation2 [shape = 'f32[1]{0:T(128)S(6)}', space=smem, size = 0x200, scoped, tag = 'scoped memory for tpu_custom_call.1']
  %s0 = inlined_call_operand.<no memory space> [shape: f32[1], index: 0, kind: input, shape index: {}]
  %s1 = inlined_call_operand.hbm [shape: f32[8,256], index: 1, kind: input, shape index: {}]
  %s2 = inlined_call_operand.hbm [shape: f32[8,256], index: 2, kind: output, shape index: {}]
  %s3 = sld [smem:[#allocation0]]
  $region22: #{tpu_custom_call.1} parent=0
    _
  %s5 = ssub.s32 1, %s3
  %s6 = scalar_select 0, %s5, %s3
  %7 = sst [smem:[#allocation2]] %s0
  $region1: #{tpu_custom_call.1} parent=0
    #allocation3 [shape = 'u8[8192]{0}', space=vmem, size = 0x2000, scoped, tag = 'input window, operand 1, single buffered']
    #allocation4 [shape = 's32[1]{0}', space=sflag, size = 0x4, scoped, tag = 'scoped memory for tpu_custom_call.1']
    #allocation5 [shape = 's32[1]{0}', space=sflag, size = 0x4, scoped, tag = 'scoped memory for tpu_custom_call.1']
    #allocation6 [shape = 'u8[8192]{0}', space=vmem, size = 0x2000, scoped, tag = 'output window, operand 0, single buffered']
    %8 = vsyncpa [#allocation4], 0
    %9 = vsyncpa [#allocation5], 0
    // Predicated region
    $region2: #{tpu_custom_call.1} parent=1 // pred_check
      _
    $region3: #{tpu_custom_call.1} parent=1 // pred_check_branch
      %11 = sbr.rel (0) target = $region5
    $region4: #{tpu_custom_call.1} parent=1 // pred_region
      _
    $region5: #{tpu_custom_call.1} parent=1 // pred_fallthru
      _
    // Predicated region
    $region6: #{tpu_custom_call.1} parent=1 // pred_check
      _
    $region7: #{tpu_custom_call.1} parent=1 // pred_check_branch
      %13 = sbr.rel (0) target = $region9
    $region8: #{tpu_custom_call.1} parent=1 // pred_region
      %15 = vsyncadd [#allocation4], 0
      %s17 = sshll.u32 %s1, 4
      %s18 = int_to_ptr.hbm [resolvable:$true] %s17
      %s19 = sshll.u32 [#allocation3], 4
      %s20 = int_to_ptr.vmem [resolvable:$true] %s19
      %22 = dma.hbm_to_vmem [thread:$0]  %s18, 256, %s20, [#allocation4]
    $region9: #{tpu_custom_call.1} parent=1 // pred_fallthru
      _
    // Predicated region
    $region10: #{tpu_custom_call.1} parent=1 // pred_check
      _
    $region11: #{tpu_custom_call.1} parent=1 // pred_check_branch
      %24 = sbr.rel (0) target = $region13
    $region12: #{tpu_custom_call.1} parent=1 // pred_region
      %26 = dma.done [#allocation4], 256
    $region13: #{tpu_custom_call.1} parent=1 // pred_fallthru
      _
    %s27 = sld [smem:[#allocation2]]
    %v28 = vld [vmem:[#allocation3] sm:$0xff]
    %v29 = vld [vmem:[#allocation3 + $0x8] sm:$0xff]
    %v30 = vmul.f32 %v28, %v28
    %v31 = vmul.f32 %v29, %v29
    %v32 = vstv %s27
    %v33 = vmul.f32 %v30, %v32
    %v34 = vmul.f32 %v31, %v32
    %v35 = vsub.f32 1.0, %v33
    %v36 = vsub.f32 1.0, %v34
    %v37 = vsub.f32 0.0, %v33
    %v38 = vsub.f32 0.0, %v34
    %v39 = vmul.f32 %v37, 1.442695
    %v40 = vpow.pop %v39
    %v41 = vmul.f32 %v38, 1.442695
    %v42 = vpow.pop %v41
    %v43 = vmul.f32 %v35, %v40
    %v44 = vmul.f32 %v36, %v42
    %45 = vst [vmem:[#allocation6] sm:$0xff] %v43
    %46 = vst [vmem:[#allocation6 + $0x8] sm:$0xff] %v44
    // Predicated region
    $region14: #{tpu_custom_call.1} parent=1 // pred_check
      _
    $region15: #{tpu_custom_call.1} parent=1 // pred_check_branch
      %48 = sbr.rel (0) target = $region17
    $region16: #{tpu_custom_call.1} parent=1 // pred_region
      %50 = vsyncadd [#allocation5], 0
      %s52 = sshll.u32 [#allocation6], 4
      %s53 = int_to_ptr.vmem [resolvable:$true] %s52
      %s54 = sshll.u32 %s2, 4
      %s55 = int_to_ptr.hbm [resolvable:$true] %s54
      %57 = dma.vmem_to_hbm [thread:$0]  %s53, 256, %s55, [#allocation5]
    $region17: #{tpu_custom_call.1} parent=1 // pred_fallthru
      _
    // Predicated region
    $region18: #{tpu_custom_call.1} parent=1 // pred_check
      _
    $region19: #{tpu_custom_call.1} parent=1 // pred_check_branch
      %59 = sbr.rel (0) target = $region21
    $region20: #{tpu_custom_call.1} parent=1 // pred_region
      %61 = dma.done [#allocation5], 256
    $region21: #{tpu_custom_call.1} parent=1 // pred_fallthru
      _
    %62 = vsyncpa [#allocation4], 1
    %63 = vsyncpa [#allocation5], 1

</llo_original>
